<compile_context>
chip_gen: v6e
topology: v6e:2x2x1
jax: 0.10.0
libtpu: 0.0.40
codegen_flags: <defaults>
</compile_context>

<pallas_src>
import functools
from collections import namedtuple

import jax
import jax.numpy as jnp
from jax.experimental import pallas as pl
from jax.experimental.pallas import tpu as pltpu

# ----------------------------------------------------------------------------
# Model configuration (small, CIFAR-like)
# ----------------------------------------------------------------------------
Genotype = namedtuple("Genotype", "normal normal_concat reduce reduce_concat")

# The fused kernel below hard-codes exactly this "normal" cell wiring.
GENOTYPE = Genotype(
    normal=[
        ("sep_conv_3x3", 0), ("skip_connect", 1),
        ("skip_connect", 0), ("avg_pool_3x3", 1),
        ("max_pool_3x3", 0), ("skip_connect", 2),
        ("skip_connect", 3), ("skip_connect", 1),
    ],
    normal_concat=[2, 3, 4, 5],
    # reduce cells are constructed in __init__ but never executed (early return)
    reduce=[("max_pool_3x3", 0), ("max_pool_3x3", 1)] * 4,
    reduce_concat=[2, 3, 4, 5],
)

C_INIT = 4            # C
LAYERS = 3            # layers (final C_curr = 16 = 4 * C after construction loop)
NUM_CLASSES = 10
IN_CHANNELS = 3
STEM_MULT = 3
C_STEM = STEM_MULT * C_INIT          # 12
C_FINAL = 4 * C_INIT                 # classifier in_features (16)
BN_EPS = 1e-5

# 3x3 tap offsets, row-major (dy, dx); tap 4 is the centre.
_OFFSETS = tuple((dy, dx) for dy in (-1, 0, 1) for dx in (-1, 0, 1))

# TODO(synk): drop_path / AuxiliaryHeadCIFAR are training-only and never run on
# this (eval, early-return) forward path, so they are intentionally not ported.


# ----------------------------------------------------------------------------
# Fused Pallas kernel: whole forward pass for one batch block, (C, NB*H*W) layout
# ----------------------------------------------------------------------------
def _network_cifar_kernel(
    # activations
    x_ref,                                   # (Cin, nb*H*W) lane-dense input slab
    # stem = Conv2d(Cin, 3C, 3, pad=1, bias=False) + BN (folded)
    wstem_ref, stem_sc_ref, stem_sh_ref,
    # cells[0] preprocess0/1 fused: ReLU -> (2C, 3C) 1x1 conv -> BN (folded)
    pre_w_ref, pre_sc_ref, pre_sh_ref,
    # sep_conv_3x3 = 2 x (ReLU -> depthwise 3x3 -> pointwise 1x1 -> BN)
    dw1_ref, pw1_ref, sc1_ref, sh1_ref,
    dw2_ref, pw2_ref, sc2_ref, sh2_ref,
    # classifier Linear(4C, num_classes)
    fcw_ref, fcb_ref,
    # output block: (1, NUM_CLASSES, nb)
    out_ref,
    # VMEM scratch for the channel concat of states[2..5]: (4C, nb*H*W)
    stk_ref,
    *, nb, hw, img_h, img_w, shifts, roll_forward):
    f32 = jnp.float32
    nhw = nb * hw

    # ---- boundary masks generated in-kernel from the lane index (no HBM operand,
    #      no mask slab held live: per-tap masks are rebuilt from 4 small rows).
    lane = jax.lax.broadcasted_iota(jnp.int32, (1, nhw), 1)
    wpos = lane % img_w
    hpos = (lane // img_w) % img_h
    h_up = jnp.where(hpos >= 1, 1.0, 0.0)            # tap dy = -1 stays in image
    h_dn = jnp.where(hpos <= img_h - 2, 1.0, 0.0)    # tap dy = +1
    w_lf = jnp.where(wpos >= 1, 1.0, 0.0)            # tap dx = -1
    w_rt = jnp.where(wpos <= img_w - 2, 1.0, 0.0)    # tap dx = +1

    def tap_mask(t):
        dy, dx = _OFFSETS[t]
        m = None
        if dy == -1:
            m = h_up
        elif dy == 1:
            m = h_dn
        if dx == -1:
            m = w_lf if m is None else m * w_lf
        elif dx == 1:
            m = w_rt if m is None else m * w_rt
        return m                                     # None => tap always valid

    def shifted(a, t):
        """Lane-shifted copy of `a` so lane p holds a[:, p + shifts[t]]."""
        d = shifts[t]
        if d == 0:
            return a
        s = (-d) % nhw if roll_forward else d % nhw
        return pltpu.roll(a, shift=s, axis=1)

    # ---- stem: Conv2d(Cin, 3C, 3, pad=1) + BN.  Taps built in-kernel via
    #      roll + zero-mask, accumulated as 9 small MXU dots over 3 ILP chains.
    x = x_ref[...]
    cin = x.shape[0]
    wstem = wstem_ref[...]
    stem_accs = [None, None, None]
    for t in range(9):
        xt = shifted(x, t)
        m = tap_mask(t)
        if m is not None:
            xt = xt * m                              # conv zero padding
        part = jnp.dot(wstem[:, cin * t:cin * (t + 1)], xt,
                       preferred_element_type=f32)
        k = t % 3
        stem_accs[k] = part if stem_accs[k] is None else stem_accs[k] + part
    stem = (stem_accs[0] + stem_accs[1]) + stem_accs[2]
    stem = stem * stem_sc_ref[...] + stem_sh_ref[...]            # (3C, nhw)

    # ---- cells[0]: preprocess0/1 fused into ONE MXU matmul (stacked weight)
    stem_relu = jnp.maximum(stem, 0.0)
    s01 = jnp.dot(pre_w_ref[...], stem_relu, preferred_element_type=f32)
    s01 = s01 * pre_sc_ref[...] + pre_sh_ref[...]                # (2C, nhw) = [s0; s1]
    c = s01.shape[0] // 2
    s0 = s01[:c, :]
    s1 = s01[c:, :]

    # ---- shared tap loop over the stacked [s0; s1] (one roll per tap feeds
    #      sep_conv stage-1 depthwise, max_pool_3x3(s0) and avg_pool_3x3(s1)).
    dw1m = dw1_ref[...]
    big = 1e30
    nc_taps = [t for t in range(9) if t != 4]        # centre tap handled up front
    acc_dw = [jnp.maximum(s0, 0.0) * dw1m[:, 4:5], None]   # ReLU -> dw3x3, chain 0/1
    acc_av = [s1, None]                                     # avg pool accumulators
    mp = [s0, None]                                         # max pool chains
    for idx, t in enumerate(nc_taps):
        st = shifted(s01, t)
        top = st[:c, :]                              # shifted s0
        bot = st[c:, :]                              # shifted s1
        m = tap_mask(t)                              # never None off-centre
        k = idx & 1
        d = (jnp.maximum(top, 0.0) * m) * dw1m[:, t:t + 1]
        acc_dw[k] = d if acc_dw[k] is None else acc_dw[k] + d
        a = bot * m
        acc_av[k] = a if acc_av[k] is None else acc_av[k] + a
        cand = top + (m - 1.0) * big                 # additive mask, no -inf
        mp[k] = cand if mp[k] is None else jnp.maximum(mp[k], cand)
    acc1 = acc_dw[0] + acc_dw[1]
    # avg_pool_3x3 with count_include_pad=False: valid-tap count from the rows.
    inv_cnt = 1.0 / ((1.0 + h_up + h_dn) * (1.0 + w_lf + w_rt))
    ap = (acc_av[0] + acc_av[1]) * inv_cnt
    mpool = jnp.maximum(mp[0], mp[1])

    def pw1x1(y, pwm):
        """Tiny pointwise 1x1 conv (contraction = C) as VPU rank-1 FMAs, 2 chains."""
        acc_a = pwm[:, 0:1] * y[0:1, :]
        acc_b = pwm[:, 1:2] * y[1:2, :]
        for ci in range(2, pwm.shape[1]):
            term = pwm[:, ci:ci + 1] * y[ci:ci + 1, :]
            if ci & 1:
                acc_b = acc_b + term
            else:
                acc_a = acc_a + term
        return acc_a + acc_b

    # sep_conv_3x3 stage 1: pw1x1 -> BN ; stage 2: ReLU -> dw3x3 -> pw1x1 -> BN
    hmid = pw1x1(acc1, pw1_ref[...]) * sc1_ref[...] + sh1_ref[...]
    hr = jnp.maximum(hmid, 0.0)
    dw2m = dw2_ref[...]
    acc_dw2 = [hr * dw2m[:, 4:5], None]
    for idx, t in enumerate(nc_taps):
        xt = shifted(hr, t)
        m = tap_mask(t)
        d = (xt * m) * dw2m[:, t:t + 1]
        k = idx & 1
        acc_dw2[k] = d if acc_dw2[k] is None else acc_dw2[k] + d
    sep = pw1x1(acc_dw2[0] + acc_dw2[1], pw2_ref[...]) * sc2_ref[...] + sh2_ref[...]

    # ---- cell DAG (GENOTYPE.normal; eval mode => no drop_path)
    st2 = sep + s1        # sep_conv_3x3(s0) + skip_connect(s1)        -> states[2]
    st3 = s0 + ap         # skip_connect(s0) + avg_pool_3x3(s1)        -> states[3]
    st4 = mpool + st2     # max_pool_3x3(s0) + skip_connect(states[2]) -> states[4]
    st5 = st3 + s1        # skip_connect(states[3]) + skip_connect(s1) -> states[5]

    # ---- concat([2,3,4,5], dim=C) into VMEM scratch -> per-image GAP via lane
    #      reductions (no GAP matrix operand) -> single classifier matmul.
    stk_ref[0 * c:1 * c, :] = st2
    stk_ref[1 * c:2 * c, :] = st3
    stk_ref[2 * c:3 * c, :] = st4
    stk_ref[3 * c:4 * c, :] = st5
    stacked = stk_ref[...]                           # (4C, nhw)

    inv_hw = 1.0 / hw
    cols = []
    for j in range(nb):
        blk = stacked[:, j * hw:(j + 1) * hw]
        cols.append(jnp.sum(blk, axis=1, keepdims=True) * inv_hw)
    pooled = cols[0] if nb == 1 else jnp.concatenate(cols, axis=1)   # (4C, nb)

    logits_t = jnp.dot(fcw_ref[...], pooled, preferred_element_type=f32) + fcb_ref[...]
    out_ref[...] = logits_t.reshape(1, logits_t.shape[0], nb)


# ----------------------------------------------------------------------------
# pltpu.roll direction calibration (tiny, one-time, lru_cached probe kernel)
# ----------------------------------------------------------------------------
@functools.lru_cache(maxsize=1)
def _roll_is_forward():
    """True iff pltpu.roll(x, s)[i] == x[i - s] (i.e. jnp.roll semantics)."""
    def probe_kernel(x_ref, o_ref):
        o_ref[...] = pltpu.roll(x_ref[...], shift=1, axis=1)

    x = jnp.broadcast_to(jnp.arange(256, dtype=jnp.float32), (8, 256))
    y = pl.pallas_call(
        probe_kernel,
        out_shape=jax.ShapeDtypeStruct((8, 256), jnp.float32),
    )(x)
    return bool(float(y[0, 1]) == 0.0)


# ----------------------------------------------------------------------------
# Wrapper: the only per-call glue is flattening the input to (Cin, N*H*W)
# ----------------------------------------------------------------------------
def network_forward(x_nchw, params, *, images_per_block=None):
    """Fused NetworkCIFAR forward.  Returns (logits, logits_aux) like the module."""
    n, cin, img_h, img_w = x_nchw.shape
    hw = img_h * img_w
    if images_per_block is None:
        # Two grid steps when the batch is even so a v7x chip can map them to its
        # two TensorCores ("parallel" axis); v5e/v6e just iterate sequentially.
        images_per_block = n // 2 if (n % 2 == 0 and n >= 2) else n
    nb = images_per_block
    assert n % nb == 0, "batch must divide evenly into image blocks"
    num_blocks = n // nb
    nhw_blk = nb * hw
    assert nhw_blk % 128 == 0, "per-block lane width must be a multiple of 128"

    shifts = tuple(dy * img_w + dx for dy, dx in _OFFSETS)
    # Boundary masks cover every lane a roll can wrap only while |shift| < H*W.
    assert max(abs(s) for s in shifts) < hw

    x_flat = jnp.transpose(x_nchw.astype(jnp.float32), (1, 0, 2, 3)).reshape(
        cin, n * hw)

    p = params
    operands = (
        x_flat,
        p["stem_w"], p["stem_scale"], p["stem_shift"],
        p["pre_w"], p["pre_scale"], p["pre_shift"],
        p["dw1"], p["pw1"], p["scale1"], p["shift1"],
        p["dw2"], p["pw2"], p["scale2"], p["shift2"],
        p["fc_w"], p["fc_b"],
    )
    fixed2 = lambda i: (0, 0)
    in_specs = [pl.BlockSpec((cin, nhw_blk), lambda i: (0, i))]
    in_specs += [pl.BlockSpec(op.shape, fixed2) for op in operands[1:]]
    out_spec = pl.BlockSpec((1, NUM_CLASSES, nb), lambda i: (i, 0, 0))

    kernel = functools.partial(
        _network_cifar_kernel, nb=nb, hw=hw, img_h=img_h, img_w=img_w,
        shifts=shifts, roll_forward=_roll_is_forward())

    out = pl.pallas_call(
        kernel,
        out_shape=jax.ShapeDtypeStruct((num_blocks, NUM_CLASSES, nb), jnp.float32),
        grid=(num_blocks,),
        in_specs=in_specs,
        out_specs=out_spec,
        scratch_shapes=[pltpu.VMEM((4 * C_INIT, nhw_blk), jnp.float32)],
        compiler_params=pltpu.CompilerParams(
            dimension_semantics=("parallel",)),
    )(*operands)

    logits = jnp.transpose(out, (0, 2, 1)).reshape(n, NUM_CLASSES)
    logits_aux = None                            # eval / early-return path
    return logits, logits_aux


# ----------------------------------------------------------------------------
# Deterministic synthetic parameters (BN running stats folded to scale/shift)
# ----------------------------------------------------------------------------
def bn_fold(key, c):
    k1, k2, k3, k4 = jax.random.split(key, 4)
    gamma = 1.0 + 0.1 * jax.random.normal(k1, (c, 1), jnp.float32)
    beta = 0.1 * jax.random.normal(k2, (c, 1), jnp.float32)
    mean = 0.1 * jax.random.normal(k3, (c, 1), jnp.float32)
    var = 1.0 + 0.1 * jax.random.uniform(k4, (c, 1), jnp.float32)
    scale = gamma / jnp.sqrt(var + BN_EPS)
    shift = beta - mean * scale
    return scale, shift


def init_params(key):
    ks = iter(jax.random.split(key, 24))
    nk = lambda: next(ks)
    p = {}
    # stem Conv2d(Cin, 3C, 3, pad=1, bias=False) weight flattened to (C_out, 9*C_in),
    # columns ordered (tap=(dy,dx), c_in) to match the in-kernel tap order.
    p["stem_w"] = 0.1 * jax.random.normal(nk(), (C_STEM, 9 * IN_CHANNELS), jnp.float32)
    p["stem_scale"], p["stem_shift"] = bn_fold(nk(), C_STEM)
    # preprocess0/1 = ReLUConvBN(3C, C, 1, 1, 0); fused at init into one (2C, 3C)
    # weight (rows [0:C) = preprocess0, rows [C:2C) = preprocess1).
    pre0_w = 0.1 * jax.random.normal(nk(), (C_INIT, C_STEM), jnp.float32)
    pre0_sc, pre0_sh = bn_fold(nk(), C_INIT)
    pre1_w = 0.1 * jax.random.normal(nk(), (C_INIT, C_STEM), jnp.float32)
    pre1_sc, pre1_sh = bn_fold(nk(), C_INIT)
    p["pre_w"] = jnp.concatenate([pre0_w, pre1_w], axis=0)
    p["pre_scale"] = jnp.concatenate([pre0_sc, pre1_sc], axis=0)
    p["pre_shift"] = jnp.concatenate([pre0_sh, pre1_sh], axis=0)
    # sep_conv_3x3: dw weight (C, 9 taps), pw weight (C_out, C_in), folded BN
    p["dw1"] = 0.1 * jax.random.normal(nk(), (C_INIT, 9), jnp.float32)
    p["pw1"] = 0.1 * jax.random.normal(nk(), (C_INIT, C_INIT), jnp.float32)
    p["scale1"], p["shift1"] = bn_fold(nk(), C_INIT)
    p["dw2"] = 0.1 * jax.random.normal(nk(), (C_INIT, 9), jnp.float32)
    p["pw2"] = 0.1 * jax.random.normal(nk(), (C_INIT, C_INIT), jnp.float32)
    p["scale2"], p["shift2"] = bn_fold(nk(), C_INIT)
    # classifier Linear(4C, num_classes): weight (num_classes, 4C), bias (num_classes, 1)
    p["fc_w"] = 0.1 * jax.random.normal(nk(), (NUM_CLASSES, C_FINAL), jnp.float32)
    p["fc_b"] = 0.1 * jax.random.normal(nk(), (NUM_CLASSES, 1), jnp.float32)
    return p


# ----------------------------------------------------------------------------
# Pure-JAX (non-Pallas) reference of the same forward pass, for validation
# ----------------------------------------------------------------------------
def reference_forward(x_nchw, p):
    hp = jax.lax.Precision.HIGHEST
    n, cin, h, w = x_nchw.shape
    nhw = n * h * w
    x_nchw = x_nchw.astype(jnp.float32)

    def to_flat(a):                              # (N, C, H, W) -> (C, NHW)
        return jnp.transpose(a, (1, 0, 2, 3)).reshape(a.shape[1], nhw)

    def taps(flat, pad_val):
        c = flat.shape[0]
        sp = jnp.transpose(flat.reshape(c, n, h, w), (1, 0, 2, 3))
        sp = jnp.pad(sp, ((0, 0), (0, 0), (1, 1), (1, 1)), constant_values=pad_val)
        return [to_flat(sp[:, :, 1 + dy:1 + dy + h, 1 + dx:1 + dx + w])
                for dy, dx in _OFFSETS]

    xt = taps(to_flat(x_nchw), 0.0)
    stem = sum(jnp.dot(p["stem_w"][:, cin * t:cin * (t + 1)], xt[t], precision=hp)
               for t in range(9))
    stem = stem * p["stem_scale"] + p["stem_shift"]

    sr = jnp.maximum(stem, 0.0)
    s01 = jnp.dot(p["pre_w"], sr, precision=hp) * p["pre_scale"] + p["pre_shift"]
    c = s01.shape[0] // 2
    s0, s1 = s01[:c], s01[c:]

    def sep_stage(xq, dw, pw, sc, sh):
        tl = taps(jnp.maximum(xq, 0.0), 0.0)
        acc = sum(tl[t] * dw[:, t:t + 1] for t in range(9))
        return jnp.dot(pw, acc, precision=hp) * sc + sh

    sep = sep_stage(s0, p["dw1"], p["pw1"], p["scale1"], p["shift1"])
    sep = sep_stage(sep, p["dw2"], p["pw2"], p["scale2"], p["shift2"])
    st2 = sep + s1

    cnt = sum(taps(jnp.ones((1, nhw), jnp.float32), 0.0))
    st3 = s0 + sum(taps(s1, 0.0)) / cnt

    mpool = functools.reduce(jnp.maximum, taps(s0, -jnp.inf))
    st4 = mpool + st2

    st5 = st3 + s1

    out = jnp.concatenate([st2, st3, st4, st5], axis=0)          # (4C, NHW)
    pooled = out.reshape(out.shape[0], n, h * w).mean(axis=-1)   # (4C, N)
    logits_t = jnp.dot(p["fc_w"], pooled, precision=hp) + p["fc_b"]
    return logits_t.T, None


# ----------------------------------------------------------------------------
if __name__ == "__main__":
    x = jax.random.normal(jax.random.PRNGKey(0), (2, IN_CHANNELS, 16, 16), jnp.float32)
    params = init_params(jax.random.PRNGKey(42))

    logits, logits_aux = network_forward(x, params)
    logits = jax.block_until_ready(logits)

    assert logits.shape == (2, NUM_CLASSES), logits.shape
    assert logits_aux is None
    assert bool(jnp.all(jnp.isfinite(logits)))

    ref_logits, _ = reference_forward(x, params)
    max_err = float(jnp.max(jnp.abs(logits - ref_logits)))
    assert max_err < 2e-3, f"kernel/reference mismatch: max abs err {max_err}"
    print("KERNEL_OK")
</pallas_src>

<mosaic_0001>
module attributes {stable_mosaic.version = 11 : i64} {
  func.func @probe_kernel(%arg0: memref<8x256xf32, #tpu.memory_space<vmem>>, %arg1: memref<8x256xf32, #tpu.memory_space<vmem>>) attributes {dimension_semantics = [], scalar_prefetch = 0 : i64, scratch_operands = 0 : i64, tpu.core_type = #tpu.core_type<tc>} {
    %c0 = arith.constant 0 : index
    %c0_0 = arith.constant 0 : index
    %0 = vector.load %arg0[%c0, %c0_0] : memref<8x256xf32, #tpu.memory_space<vmem>>, vector<8x256xf32>
    %c1_i32 = arith.constant 1 : i32
    %1 = tpu.dynamic_rotate %0 by %c1_i32 dim 1 : vector<8x256xf32>, i32 -> vector<8x256xf32>
    %c0_1 = arith.constant 0 : index
    %c0_2 = arith.constant 0 : index
    %2 = vector.load %arg1[%c0_1, %c0_2] : memref<8x256xf32, #tpu.memory_space<vmem>>, vector<8x256xf32>
    tpu.vector_store %arg1[%c0_1, %c0_2], %1 {strides = array<i32>} : memref<8x256xf32, #tpu.memory_space<vmem>>, vector<8x256xf32>,
    return
  }
}

</mosaic_0001>

<llo_original>
// kernel: tpu_custom_call.1
$region0: #{tpu_custom_call.1}
  #allocation0 [shape = 'u32[]', space=smem, size = 0x4, offset = 0x4, fixed_abs, tag = 'smem constant byte address 0x4 - core index']
  #allocation1 [shape = 'u32[144,128]{1,0:T(1,128)}', space=vmem, size = 0x12000, scoped, tag = 'internal scratch']
  %s0 = inlined_call_operand.hbm [shape: f32[8,256], index: 0, kind: input, shape index: {}]
  %s1 = inlined_call_operand.hbm [shape: f32[8,256], index: 1, kind: output, shape index: {}]
  %s2 = sld [smem:[#allocation0]]
  $region18: #{tpu_custom_call.1} parent=0
    _
  %s4 = ssub.s32 1, %s2
  %s5 = scalar_select 0, %s4, %s2
  $region1: #{tpu_custom_call.1} parent=0
    #allocation2 [shape = 'u8[8192]{0}', space=vmem, size = 0x2000, scoped, tag = 'input window, operand 0, single buffered']
    #allocation3 [shape = 's32[1]{0}', space=sflag, size = 0x4, scoped, tag = 'scoped memory for tpu_custom_call.1']
    #allocation4 [shape = 's32[1]{0}', space=sflag, size = 0x4, scoped, tag = 'scoped memory for tpu_custom_call.1']
    #allocation5 [shape = 'u8[8192]{0}', space=vmem, size = 0x2000, scoped, tag = 'output window, operand 0, single buffered']
    %6 = vsyncpa [#allocation3], 0
    %7 = vsyncpa [#allocation4], 0
    // Predicated region
    $region2: #{tpu_custom_call.1} parent=1 // pred_check
      _
    $region3: #{tpu_custom_call.1} parent=1 // pred_check_branch
      %9 = sbr.rel (0) target = $region5
    $region4: #{tpu_custom_call.1} parent=1 // pred_region
      %s11 = ssub.s32 256, 256
      %12 = vsyncadd [#allocation3], %s11
      %s14 = sshll.u32 [#allocation2], 4
      %s15 = int_to_ptr.vmem [resolvable:$true] %s14
      %17 = dma.hbm_to_vmem [thread:$0]  %s0, 256, %s15, [#allocation3]
    $region5: #{tpu_custom_call.1} parent=1 // pred_fallthru
      _
    // Predicated region
    $region6: #{tpu_custom_call.1} parent=1 // pred_check
      _
    $region7: #{tpu_custom_call.1} parent=1 // pred_check_branch
      %19 = sbr.rel (0) target = $region9
    $region8: #{tpu_custom_call.1} parent=1 // pred_region
      %20 = dma.done [#allocation3], 256
    $region9: #{tpu_custom_call.1} parent=1 // pred_fallthru
      _
    %v21 = vld [vmem:[#allocation2] sm:$0xff]
    %v22 = vld [vmem:[#allocation2 + $0x8] sm:$0xff]
    %23 = vrot.lane.b32.xlu0 %v21, 1
    %v24 = vpop.permute.xlu0 %23
    %25 = vrot.lane.b32.xlu0 %v22, 1
    %v26 = vpop.permute.xlu0 %25
    %v27 = vlaneseq
    %v28 = vand.u32 %v27, 127
    %vm29 = vcmp.lt.s32.totalorder %v28, 1
    %v30 = vsel %vm29, %v24, %v26
    %v31 = vsel %vm29, %v26, %v24
    %32 = vst [vmem:[#allocation5] sm:$0xff] %v31
    %33 = vst [vmem:[#allocation5 + $0x8] sm:$0xff] %v30
    // Predicated region
    $region10: #{tpu_custom_call.1} parent=1 // pred_check
      _
    $region11: #{tpu_custom_call.1} parent=1 // pred_check_branch
      %35 = sbr.rel (0) target = $region13
    $region12: #{tpu_custom_call.1} parent=1 // pred_region
      %s37 = ssub.s32 256, 256
      %38 = vsyncadd [#allocation4], %s37
      %s40 = sshll.u32 [#allocation5], 4
      %s41 = int_to_ptr.vmem [resolvable:$true] %s40
      %43 = dma.vmem_to_hbm [thread:$0]  %s41, 256, %s1, [#allocation4]
    $region13: #{tpu_custom_call.1} parent=1 // pred_fallthru
      _
    // Predicated region
    $region14: #{tpu_custom_call.1} parent=1 // pred_check
      _
    $region15: #{tpu_custom_call.1} parent=1 // pred_check_branch
      %45 = sbr.rel (0) target = $region17
    $region16: #{tpu_custom_call.1} parent=1 // pred_region
      %46 = dma.done [#allocation4], 256
    $region17: #{tpu_custom_call.1} parent=1 // pred_fallthru
      _
    %47 = vsyncpa [#allocation3], 1
    %48 = vsyncpa [#allocation4], 1

</llo_original>
